<compile_context>
chip_gen: v7x
topology: tpu7x:2x2x1
jax: 0.10.0
libtpu: 0.0.40
codegen_flags: <defaults>
</compile_context>

<pallas_src>
import functools
import math

import jax
import jax.numpy as jnp
from jax import lax
from jax.experimental import pallas as pl
from jax.experimental.pallas import tpu as pltpu

_MIB = 1024 * 1024


def _round_up(x, m):
    return (x + m - 1) // m * m


# ----------------------------------------------------------------------------
# Kernels
# ----------------------------------------------------------------------------
def _embed_kernel_onehot(ids_ref, table_ref, out_ref, *, scale, vocab):
    """Small-vocab path: gather == one-hot @ table on the MXU (fully dense)."""
    # ids_ref:   (tile, 1) int32 VMEM block of token ids
    # table_ref: (vocab, d_model) VMEM-resident table (fetched once, 1 buffer)
    # out_ref:   (tile, d_model) VMEM output block
    ids = ids_ref[...]                                              # (tile, 1)
    iota = lax.broadcasted_iota(jnp.int32, (ids.shape[0], vocab), 1)
    onehot = (ids == iota).astype(table_ref.dtype)                  # (tile, vocab)
    acc = jnp.dot(onehot, table_ref[...], preferred_element_type=jnp.float32)
    out_ref[...] = (acc * scale).astype(out_ref.dtype)


def _embed_kernel_resident(ids_ref, table_ref, out_ref, *, scale, tile):
    """Resident-table path: raw per-row VMEM gather, then ONE dense scale pass."""
    # ids_ref:   (n_padded,) int32 in SMEM (scalar prefetch)
    # table_ref: (vocab, d_model) VMEM-resident table (fetched once, 1 buffer)
    # out_ref:   (tile, d_model) VMEM output block
    base = pl.program_id(0) * tile

    @pl.loop(0, tile)
    def _(t):
        row = ids_ref[base + t]
        # Raw row copy only; no per-row mul/cast (those ran on 1/8-filled vregs).
        out_ref[pl.ds(t, 1), :] = table_ref[pl.ds(row, 1), :]

    # Single dense pass: full (8,128) vregs, unmasked stores.
    out_ref[...] = (out_ref[...].astype(jnp.float32) * scale).astype(out_ref.dtype)


def _embed_kernel_dma(ids_ref, table_hbm, out_ref, sem, *, scale, tile):
    """Large-vocab path: per-row HBM DMAs straight into out_ref, one wait per tile."""
    # ids_ref:   (n_padded,) int32 in SMEM (scalar prefetch)
    # table_hbm: (vocab, d_model) raw HBM ref (memory_space=pl.ANY)
    # out_ref:   (tile, d_model) VMEM output block (also the gather destination)
    # sem:       (1,) DMA semaphore
    base = pl.program_id(0) * tile

    @pl.loop(0, tile)
    def _(t):
        row = ids_ref[base + t]
        pltpu.make_async_copy(table_hbm.at[row], out_ref.at[t], sem.at[0]).start()

    # One collapsed wait for the whole tile: this descriptor's byte count
    # (tile * d_model * itemsize) equals the sum of the `tile` per-row copies
    # above, so the wait completes only after ALL rows have landed in out_ref.
    pltpu.make_async_copy(table_hbm.at[pl.ds(0, tile)], out_ref, sem.at[0]).wait()

    # Single dense scale+cast pass, in place.
    out_ref[...] = (out_ref[...].astype(jnp.float32) * scale).astype(out_ref.dtype)


# ----------------------------------------------------------------------------
# Wrapper
# ----------------------------------------------------------------------------
def input_embeddings(token_ids, embedding_table, *, tile=None,
                     vmem_table_budget_bytes=None, max_onehot_vocab=2048):
    """Pallas equivalent of InputEmbeddings.forward: table[x] * sqrt(d_model)."""
    vocab_size, d_model = embedding_table.shape
    lead_shape = token_ids.shape
    out_dtype = embedding_table.dtype
    itemsize = embedding_table.dtype.itemsize
    scale = math.sqrt(float(d_model))

    flat_ids = token_ids.reshape(-1).astype(jnp.int32)
    # Keep gathers in-bounds even for bad ids (PyTorch would fault); valid ids
    # are unaffected.
    flat_ids = jnp.clip(flat_ids, 0, vocab_size - 1)
    n = flat_ids.shape[0]

    # ---- generation-aware sizing -------------------------------------------
    try:
        vmem_cap = int(pltpu.get_tpu_info().vmem_capacity_bytes)
    except Exception:
        vmem_cap = 64 * _MIB  # conservative fallback (v7x per-TC VMEM)

    # Sublane pack of the table dtype: 8 rows f32, 16 bf16, 32 int8.
    pack = 8 * max(1, 4 // itemsize)

    if tile is None:
        tile = 512 if (vmem_cap >= 96 * _MIB and d_model <= 2048) else 256
    tile = max(pack, _round_up(tile, pack))
    # Output blocks are double-buffered by the pipeline; keep them <= VMEM/4.
    max_tile = max(pack, ((vmem_cap // 4) // (2 * d_model * itemsize)) // pack * pack)
    tile = min(tile, max_tile)
    tile = min(tile, max(pack, _round_up(n, pack)))

    n_padded = _round_up(n, tile)
    if n_padded != n:
        flat_ids = jnp.pad(flat_ids, (0, n_padded - n))
    num_tiles = n_padded // tile

    out_buf_bytes = 2 * tile * d_model * itemsize   # double-buffered out block
    table_bytes = vocab_size * d_model * itemsize

    if vmem_table_budget_bytes is None:
        # Resident table is single-buffered (pl.Buffered(1)); leave room for
        # the double-buffered output block plus pipeline/internal headroom.
        vmem_table_budget_bytes = min(int(0.85 * vmem_cap),
                                      vmem_cap - out_buf_bytes - 16 * _MIB)

    resident = table_bytes <= vmem_table_budget_bytes
    use_onehot = resident and vocab_size <= max_onehot_vocab

    if resident:
        needed = table_bytes + out_buf_bytes
        if use_onehot:
            needed += tile * vocab_size * 8          # one-hot / iota intermediates
    else:
        needed = out_buf_bytes
    vmem_limit = int(min(vmem_cap, max(needed + 16 * _MIB, 32 * _MIB)))

    compiler_params = pltpu.CompilerParams(
        # Token tiles are independent -> shard across TCs on v7x; neutral elsewhere.
        dimension_semantics=("parallel",),
        vmem_limit_bytes=vmem_limit,
    )

    if use_onehot:
        # Small vocab: dense one-hot MXU matmul, no per-row ops at all.
        ids_col = flat_ids.reshape(n_padded, 1)
        kernel = functools.partial(_embed_kernel_onehot, scale=scale,
                                   vocab=vocab_size)
        grid_spec = pltpu.PrefetchScalarGridSpec(
            num_scalar_prefetch=0,
            grid=(num_tiles,),
            in_specs=[
                pl.BlockSpec((tile, 1), lambda i: (i, 0)),
                pl.BlockSpec((vocab_size, d_model), lambda i: (0, 0),
                             pipeline_mode=pl.Buffered(1)),
            ],
            out_specs=pl.BlockSpec((tile, d_model), lambda i: (i, 0)),
        )
        args = (ids_col, embedding_table)
    elif resident:
        # Medium vocab: whole table resident in VMEM (HBM touched once),
        # per-row VMEM gather + one dense scale pass.
        kernel = functools.partial(_embed_kernel_resident, scale=scale, tile=tile)
        grid_spec = pltpu.PrefetchScalarGridSpec(
            num_scalar_prefetch=1,
            grid=(num_tiles,),
            in_specs=[
                pl.BlockSpec((vocab_size, d_model), lambda i, ids: (0, 0),
                             pipeline_mode=pl.Buffered(1)),
            ],
            out_specs=pl.BlockSpec((tile, d_model), lambda i, ids: (i, 0)),
        )
        args = (flat_ids, embedding_table)
    else:
        # Large vocab: table stays in HBM; many in-flight per-row DMAs gathered
        # directly into the output block, one collapsed wait per tile.
        kernel = functools.partial(_embed_kernel_dma, scale=scale, tile=tile)
        grid_spec = pltpu.PrefetchScalarGridSpec(
            num_scalar_prefetch=1,
            grid=(num_tiles,),
            in_specs=[pl.BlockSpec(memory_space=pl.ANY)],
            out_specs=pl.BlockSpec((tile, d_model), lambda i, ids: (i, 0)),
            scratch_shapes=[pltpu.SemaphoreType.DMA((1,))],
        )
        args = (flat_ids, embedding_table)

    out_flat = pl.pallas_call(
        kernel,
        out_shape=jax.ShapeDtypeStruct((n_padded, d_model), out_dtype),
        grid_spec=grid_spec,
        compiler_params=compiler_params,
    )(*args)

    return out_flat[:n].reshape(*lead_shape, d_model)


# ----------------------------------------------------------------------------
# Self-test
# ----------------------------------------------------------------------------
if __name__ == "__main__":
    key = jax.random.PRNGKey(0)

    # --- Case 1: small vocab -> one-hot MXU resident path --------------------
    d_model, vocab_size = 128, 64
    batch, seq = 2, 8
    k_emb, k_ids, key = jax.random.split(key, 3)
    table = jax.random.normal(k_emb, (vocab_size, d_model), dtype=jnp.float32)
    token_ids = jax.random.randint(k_ids, (batch, seq), 0, vocab_size,
                                   dtype=jnp.int32)

    out = jax.block_until_ready(input_embeddings(token_ids, table))
    ref = jnp.take(table, token_ids, axis=0) * math.sqrt(d_model)
    assert out.shape == (batch, seq, d_model)
    assert jnp.allclose(out, ref, atol=1e-4, rtol=1e-4)

    # --- Case 2: force the resident per-row gather path -----------------------
    d_model2, vocab_size2 = 256, 512
    batch2, seq2 = 2, 24
    k_emb2, k_ids2 = jax.random.split(key)
    table2 = jax.random.normal(k_emb2, (vocab_size2, d_model2), dtype=jnp.float32)
    token_ids2 = jax.random.randint(k_ids2, (batch2, seq2), 0, vocab_size2,
                                    dtype=jnp.int32)
    ref2 = jnp.take(table2, token_ids2, axis=0) * math.sqrt(d_model2)

    out2 = jax.block_until_ready(
        input_embeddings(token_ids2, table2, max_onehot_vocab=0))
    assert out2.shape == (batch2, seq2, d_model2)
    assert jnp.allclose(out2, ref2, atol=1e-5, rtol=1e-5)

    # --- Case 3: force the HBM manual-DMA gather path --------------------------
    out3 = jax.block_until_ready(
        input_embeddings(token_ids2, table2, vmem_table_budget_bytes=0))
    assert out3.shape == (batch2, seq2, d_model2)
    assert jnp.allclose(out3, ref2, atol=1e-5, rtol=1e-5)

    print("KERNEL_OK")
</pallas_src>

<mosaic_0001>
module attributes {stable_mosaic.version = 11 : i64} {
  func.func @_embed_kernel_onehot(%arg0: i32, %arg1: memref<16x1xi32, #tpu.memory_space<vmem>>, %arg2: memref<64x128xf32, #tpu.memory_space<vmem>>, %arg3: memref<16x128xf32, #tpu.memory_space<vmem>>) attributes {dimension_semantics = [#tpu.dimension_semantics<parallel>], iteration_bounds = array<i64: 1>, scalar_prefetch = 0 : i64, scratch_operands = 0 : i64, tpu.core_type = #tpu.core_type<tc>, window_params = [{transform_indices = @transform_0, window_bounds = array<i64: 16, 1>}, {pipeline_mode = #tpu.pipeline_mode<synchronous>, transform_indices = @transform_1, window_bounds = array<i64: 64, 128>}, {transform_indices = @transform_2, window_bounds = array<i64: 16, 128>}]} {
    %c0 = arith.constant 0 : index
    %c0_0 = arith.constant 0 : index
    %0 = vector.load %arg1[%c0, %c0_0] : memref<16x1xi32, #tpu.memory_space<vmem>>, vector<16x1xi32>
    %1 = tpu.iota {dimensions = array<i32: 1>} : vector<16x64xi32>
    %2 = vector.broadcast %0 : vector<16x1xi32> to vector<16x64xi32>
    %3 = arith.cmpi eq, %2, %1 : vector<16x64xi32>
    %4 = arith.extui %3 : vector<16x64xi1> to vector<16x64xi32>
    %5 = arith.sitofp %4 : vector<16x64xi32> to vector<16x64xf32>
    %c0_1 = arith.constant 0 : index
    %c0_2 = arith.constant 0 : index
    %6 = vector.load %arg2[%c0_1, %c0_2] : memref<64x128xf32, #tpu.memory_space<vmem>>, vector<64x128xf32>
    %cst = arith.constant dense<0.000000e+00> : vector<16x128xf32>
    %7 = tpu.matmul %5, %6, %cst {dimension_numbers = #tpu.dot_dimension_numbers<[1], [0], [0], [1], [0, 0, 1, 1], [], []>} : vector<16x64xf32>, vector<64x128xf32>, vector<16x128xf32> -> vector<16x128xf32>
    %cst_3 = arith.constant 11.3137083 : f32
    %8 = vector.broadcast %cst_3 : f32 to vector<16x128xf32>
    %9 = arith.mulf %7, %8 : vector<16x128xf32>
    %c0_4 = arith.constant 0 : index
    %c0_5 = arith.constant 0 : index
    %10 = vector.load %arg3[%c0_4, %c0_5] : memref<16x128xf32, #tpu.memory_space<vmem>>, vector<16x128xf32>
    tpu.vector_store %arg3[%c0_4, %c0_5], %9 {strides = array<i32>} : memref<16x128xf32, #tpu.memory_space<vmem>>, vector<16x128xf32>,
    return
  }
  func.func @transform_0(%arg0: i32) -> (i32, i32) {
    %c0_i32 = arith.constant 0 : i32
    %c0_i32_0 = arith.constant 0 : i32
    return %arg0, %c0_i32 : i32, i32
  }
  func.func @transform_1(%arg0: i32) -> (i32, i32) {
    %c0_i32 = arith.constant 0 : i32
    %c0_i32_0 = arith.constant 0 : i32
    %c0_i32_1 = arith.constant 0 : i32
    return %c0_i32, %c0_i32_0 : i32, i32
  }
  func.func @transform_2(%arg0: i32) -> (i32, i32) {
    %c0_i32 = arith.constant 0 : i32
    %c0_i32_0 = arith.constant 0 : i32
    return %arg0, %c0_i32 : i32, i32
  }
}

</mosaic_0001>

<llo_original>
// kernel: tpu_custom_call.1
$region0: #{tpu_custom_call.1}
  #allocation0 [shape = 'u32[]', space=smem, size = 0x4, offset = 0x4, fixed_abs, tag = 'smem constant byte address 0x4 - core index']
  #allocation1 [shape = 'u32[144,128]{1,0:T(1,128)}', space=vmem, size = 0x12000, scoped, tag = 'internal scratch']
  %s0 = inlined_call_operand.vmem [shape: s32[16,1], index: 0, kind: input, shape index: {}]
  %s1 = inlined_call_operand.hbm [shape: f32[64,128], index: 1, kind: input, shape index: {}]
  %s2 = inlined_call_operand.hbm [shape: f32[16,128], index: 2, kind: output, shape index: {}]
  %s3 = sld [smem:[#allocation0]]
  $region22: #{tpu_custom_call.1} parent=0
    _
  %s5 = ssub.s32 1, %s3
  %s6 = scalar_select 0, %s5, %s3
  $region1: #{tpu_custom_call.1} parent=0
    #allocation2 [shape = 'u8[32768]{0}', space=vmem, size = 0x8000, scoped, tag = 'input window, operand 1, single buffered']
    #allocation3 [shape = 's32[1]{0}', space=sflag, size = 0x4, scoped, tag = 'scoped memory for tpu_custom_call.1']
    #allocation4 [shape = 's32[1]{0}', space=sflag, size = 0x4, scoped, tag = 'scoped memory for tpu_custom_call.1']
    #allocation5 [shape = 'u8[8192]{0}', space=vmem, size = 0x2000, scoped, tag = 'output window, operand 0, single buffered']
    %7 = vsyncpa [#allocation3], 0
    %8 = vsyncpa [#allocation4], 0
    // Predicated region
    $region2: #{tpu_custom_call.1} parent=1 // pred_check
      _
    $region3: #{tpu_custom_call.1} parent=1 // pred_check_branch
      %10 = sbr.rel (0) target = $region5
    $region4: #{tpu_custom_call.1} parent=1 // pred_region
      _
    $region5: #{tpu_custom_call.1} parent=1 // pred_fallthru
      _
    // Predicated region
    $region6: #{tpu_custom_call.1} parent=1 // pred_check
      _
    $region7: #{tpu_custom_call.1} parent=1 // pred_check_branch
      %12 = sbr.rel (0) target = $region9
    $region8: #{tpu_custom_call.1} parent=1 // pred_region
      %s14 = ssub.s32 1024, 1024
      %15 = vsyncadd [#allocation3], %s14
      %s16 = sshll.u32 [#allocation2], 4
      %s17 = int_to_ptr.vmem [resolvable:$true] %s16
      %22 = dma.hbm_to_vmem [thread:$0]  %s1, 1024, %s17, [#allocation3], 128, 128, 8
    $region9: #{tpu_custom_call.1} parent=1 // pred_fallthru
      _
    // Predicated region
    $region10: #{tpu_custom_call.1} parent=1 // pred_check
      _
    $region11: #{tpu_custom_call.1} parent=1 // pred_check_branch
      %24 = sbr.rel (0) target = $region13
    $region12: #{tpu_custom_call.1} parent=1 // pred_region
      %25 = dma.done [#allocation3], 1024
    $region13: #{tpu_custom_call.1} parent=1 // pred_fallthru
      _
    %v26 = vld [vmem:[%s0] sm:$0xff]
    %v27 = vld [vmem:[%s0 + $0x8] sm:$0xff]
    %v28 = vlaneseq
    %v29 = vand.u32 %v28, 127
    %30 = vset.pattern.permute.xlu0 0
    %31 = vperm.xlu0 %30, %v26
    %v32 = vpop.permute.xlu0 %31
    %33 = vset.pattern.permute.xlu0 0
    %34 = vperm.xlu0 %33, %v27
    %v35 = vpop.permute.xlu0 %34
    %vm36 = vcmp.eq.s32.totalorder %v32, %v29
    %vm37 = vcmp.eq.s32.totalorder %v35, %v29
    %v38 = vsel %vm36, 1, 0
    %v39 = vsel %vm37, 1, 0
    %v40 = vcvt.s32.f32 %v38
    %v41 = vcvt.s32.f32 %v39
    %v42 = vld [vmem:[#allocation2] sm:$0xff]
    %v43 = vld [vmem:[#allocation2 + $0x8] sm:$0xff]
    %v44 = vld [vmem:[#allocation2 + $0x10] sm:$0xff]
    %v45 = vld [vmem:[#allocation2 + $0x18] sm:$0xff]
    %v46 = vld [vmem:[#allocation2 + $0x20] sm:$0xff]
    %v47 = vld [vmem:[#allocation2 + $0x28] sm:$0xff]
    %v48 = vld [vmem:[#allocation2 + $0x30] sm:$0xff]
    %v49 = vld [vmem:[#allocation2 + $0x38] sm:$0xff]
    %vm50 = vcmask 523264
    %v52 = vsel %vm50, %v40, 0
    %v55 = vsel %vm50, %v41, 0
    %57 = vmatprep.subr.mxu0 0.0
    %58 = vmatpush1.msra.mxu0 %v42
    %59 = vmatprep.subr.mxu0 0.0
    %60 = vmatpush1.msra.mxu0 %v43
    %61 = vmatprep.subr.mxu0 0.0
    %62 = vmatpush1.msra.mxu0 %v44
    %63 = vmatprep.subr.mxu0 0.0
    %64 = vmatpush1.msra.mxu0 %v45
    %65 = vmatprep.subr.mxu0 0.0
    %66 = vmatpush1.msra.mxu0 %v46
    %67 = vmatprep.subr.mxu0 0.0
    %68 = vmatpush1.msra.mxu0 %v47
    %69 = vmatprep.subr.mxu0 0.0
    %70 = vmatpush1.msra.mxu0 %v48
    %71 = vmatprep.subr.mxu0 0.0
    %72 = vmatpush1.msra.mxu0 %v49
    %73 = vmatprep.subr.mxu0 0.0
    %74 = vmatpush1.msra.mxu0 0.0
    %75 = vmatprep.subr.mxu0 0.0
    %76 = vmatpush1.msra.mxu0 0.0
    %77 = vmatprep.subr.mxu0 0.0
    %78 = vmatpush1.msra.mxu0 0.0
    %79 = vmatprep.subr.mxu0 0.0
    %80 = vmatpush1.msra.mxu0 0.0
    %81 = vmatprep.subr.mxu0 0.0
    %82 = vmatpush1.msra.mxu0 0.0
    %83 = vmatprep.subr.mxu0 0.0
    %84 = vmatpush1.msra.mxu0 0.0
    %85 = vmatprep.subr.mxu0 0.0
    %86 = vmatpush1.msra.mxu0 0.0
    %87 = vmatprep.subr.mxu0 0.0
    %88 = vmatpush1.msra.mxu0 0.0
    %89 = vmatprep.subr.mxu0 0.0
    %90 = vmatpush1.msra.mxu0 0.0
    %91 = vmatprep.subr.mxu0 0.0
    %92 = vmatpush1.msra.mxu0 0.0
    %93 = vmatprep.subr.mxu0 0.0
    %94 = vmatpush1.msra.mxu0 0.0
    %95 = vmatprep.subr.mxu0 0.0
    %96 = vmatpush1.msra.mxu0 0.0
    %97 = vmatprep.subr.mxu0 0.0
    %98 = vmatpush1.msra.mxu0 0.0
    %99 = vmatprep.subr.mxu0 0.0
    %100 = vmatpush1.msra.mxu0 0.0
    %101 = vmatprep.subr.mxu0 0.0
    %102 = vmatpush1.msra.mxu0 0.0
    %103 = vmatprep.subr.mxu0 0.0
    %104 = vmatpush1.msra.mxu0 0.0
    %105 = vmatprep.subr.mxu0 0.0
    %106 = vmatpush1.msra.mxu0 0.0
    %107 = vmatprep.subr.mxu0 0.0
    %108 = vmatpush1.msra.mxu0 0.0
    %109 = vmatprep.subr.mxu0 0.0
    %110 = vmatpush1.msra.mxu0 0.0
    %111 = vmatprep.subr.mxu0 0.0
    %112 = vmatpush1.msra.mxu0 0.0
    %113 = vmatprep.subr.mxu0 0.0
    %114 = vmatpush1.msra.mxu0 0.0
    %115 = vmatprep.subr.mxu0 0.0
    %116 = vmatpush1.msra.mxu0 0.0
    %117 = vmatprep.subr.mxu0 0.0
    %118 = vmatpush1.msra.mxu0 0.0
    %119 = vmatprep.subr.mxu0 0.0
    %120 = vmatpush1.msra.mxu0 0.0
    %121 = vmatprep.mubr.f32.mxu0 0.0
    %122 = vmatmul.mubr.f32.gmra.mrb[0].mxu0 %v52
    %v123 = vpop.f32.mrb[0].mxu0
    %v124 = vadd.f32 0.0, %v123
    %v125 = vpop.f32.mrb[0].mxu0
    %126 = vmatprep.mubr.f32.mxu0 0.0
    %127 = vmatmul.mubr.f32.gmra.mrb[0].mxu0 %v55
    %v128 = vpop.f32.mrb[0].mxu0
    %v129 = vadd.f32 0.0, %v128
    %v130 = vpop.f32.mrb[0].mxu0
    %131 = vdwg.mxu0
    %v132 = vmul.f32 %v124, 11.313708
    %v133 = vmul.f32 %v129, 11.313708
    %134 = vst [vmem:[#allocation5] sm:$0xff] %v132
    %135 = vst [vmem:[#allocation5 + $0x8] sm:$0xff] %v133
    // Predicated region
    $region14: #{tpu_custom_call.1} parent=1 // pred_check
      _
    $region15: #{tpu_custom_call.1} parent=1 // pred_check_branch
      %137 = sbr.rel (0) target = $region17
    $region16: #{tpu_custom_call.1} parent=1 // pred_region
      %s139 = ssub.s32 256, 256
      %140 = vsyncadd [#allocation4], %s139
      %s141 = sshll.u32 [#allocation5], 4
      %s142 = int_to_ptr.vmem [resolvable:$true] %s141
      %147 = dma.vmem_to_hbm [thread:$0]  %s142, 256, %s2, [#allocation4], 128, 128, 8
    $region17: #{tpu_custom_call.1} parent=1 // pred_fallthru
      _
    // Predicated region
    $region18: #{tpu_custom_call.1} parent=1 // pred_check
      _
    $region19: #{tpu_custom_call.1} parent=1 // pred_check_branch
      %149 = sbr.rel (0) target = $region21
    $region20: #{tpu_custom_call.1} parent=1 // pred_region
      %150 = dma.done [#allocation4], 256
    $region21: #{tpu_custom_call.1} parent=1 // pred_fallthru
      _
    %151 = vsyncpa [#allocation3], 1
    %152 = vsyncpa [#allocation4], 1

</llo_original>
